<compile_context>
chip_gen: v5e
topology: v5e:2x2
jax: 0.10.0
libtpu: 0.0.40
codegen_flags: <defaults>
</compile_context>

<pallas_src>
import functools

import jax
import jax.numpy as jnp
from jax import lax
from jax.experimental import pallas as pl
from jax.experimental.pallas import tpu as pltpu

N_EMBED = 384          # fixed by the PyTorch module
BLOCK_SIZE = 256       # tril buffer size in the module (T must be <= BLOCK_SIZE)


def _attn_kernel(x_ref, w_ref, o_ref, *, n_heads, head_size):
    # x_ref: (B_blk, T, C)            current block of batch elements
    # w_ref: (C, 3 * n_heads * H)     fused bf16 [K_all | Q_all(scaled) | V_all]
    # o_ref: (B_blk, T, n_heads * H)
    Bb, T, C = x_ref.shape
    H = head_size
    nH = n_heads

    # ---- fused QKV projection: fold batch into the matmul M dimension ----
    x2d = x_ref[...].reshape(Bb * T, C).astype(jnp.bfloat16)  # no-op cast if x is bf16
    qkv = jnp.dot(x2d, w_ref[...], preferred_element_type=jnp.float32)  # (Bb*T, 3*nH*H)
    qkv = qkv.reshape(Bb, T, 3 * nH * H)

    # ---- additive causal mask from ONE 2-D (T, T) iota, broadcast over batch ----
    row = lax.broadcasted_iota(jnp.int32, (T, T), 0)
    col = lax.broadcasted_iota(jnp.int32, (T, T), 1)
    neg = jnp.where(col <= row, jnp.float32(0.0), jnp.float32(-1e30))   # (T, T)

    outs = []
    for h in range(nH):
        # lane slices at H-alignment; if Mosaic inserts rotates here they sit as
        # filler under the DMA (kernel is HBM-bound) — left as-is per review.
        k = qkv[:, :, (0 * nH + h) * H:(0 * nH + h + 1) * H].astype(jnp.bfloat16)
        q = qkv[:, :, (1 * nH + h) * H:(1 * nH + h + 1) * H].astype(jnp.bfloat16)
        v = qkv[:, :, (2 * nH + h) * H:(2 * nH + h + 1) * H].astype(jnp.bfloat16)

        # scores: contract head dim directly (q already carries the C**-0.5 scale)
        s = jnp.einsum("btd,bsd->bts", q, k,
                       preferred_element_type=jnp.float32)              # (Bb, T, T)
        s = s + neg[None]

        # softmax along last axis, in f32
        m = jnp.max(s, axis=-1, keepdims=True)
        p = jnp.exp(s - m)
        denom = jnp.sum(p, axis=-1, keepdims=True)
        p = p * pl.reciprocal(denom, approx=True)

        outs.append(
            jnp.einsum("bts,bsh->bth", p.astype(jnp.bfloat16), v,
                       preferred_element_type=jnp.float32))              # (Bb, T, H)

    out = outs[0] if nH == 1 else jnp.concatenate(outs, axis=-1)
    o_ref[...] = out.astype(o_ref.dtype)


def _vmem_capacity_bytes():
    """Generation-aware VMEM capacity (v5e/v6e: 128 MiB, v7x: 64 MiB)."""
    try:
        info = pltpu.get_tpu_info()
        cap = int(getattr(info, "vmem_capacity_bytes", 0) or 0)
        if cap > 0:
            return cap
    except Exception:
        pass
    return 64 * 1024 * 1024   # conservative fallback = v7x physical VMEM


def _choose_batch_block(B, T, C, HO, x_itemsize, budget):
    """Batch elements per grid step, from a working-set estimate incl. temporaries."""
    per_b = (
        2 * T * C * x_itemsize      # x input block, double-buffered
        + T * C * 2                 # in-kernel bf16 copy of x
        + T * 3 * HO * (4 + 2)      # qkv f32 + bf16 k/q/v slices
        + 3 * T * HO * 4            # f32 output accum + double-buffered output block
        + 2 * T * T * (4 + 4 + 2)   # scores/exp f32 + bf16 p (x2 live-range margin)
    )
    w_bytes = 2 * C * 3 * HO * 2    # fused bf16 weight, double-buffered
    avail = max(budget - w_bytes, per_b)
    b_blk = min(B, max(1, avail // per_b), max(1, 4096 // max(T, 1)))
    # keep >= 2 grid steps per TensorCore on dual-TC chips (v7x) when batch allows
    if B >= 4:
        b_blk = min(b_blk, -(-B // 4))
    elif B >= 2:
        b_blk = min(b_blk, -(-B // 2))
    return max(1, int(b_blk))


def fused_heads_forward(x, w_keys, w_queries, w_values, *, out_dtype=jnp.float32):
    """Run n_heads independent causal Heads fused in one kernel.

    x: (B, T, C); w_keys/w_queries/w_values: sequences of (C, H) matrices
    (pre-transposed nn.Linear weights). Returns (B, T, n_heads * H).
    """
    B, T, C = x.shape
    assert C == N_EMBED and T <= BLOCK_SIZE
    nH = len(w_keys)
    H = w_keys[0].shape[1]
    HO = nH * H

    # fuse all heads' projections; fold the C**-0.5 scale into the query columns;
    # cast once in the wrapper so the kernel streams bf16 weights.
    scale = jnp.float32(C) ** jnp.float32(-0.5)
    wk = jnp.concatenate(list(w_keys), axis=1)
    wq = jnp.concatenate([w * scale for w in w_queries], axis=1)
    wv = jnp.concatenate(list(w_values), axis=1)
    w_qkv = jnp.concatenate([wk, wq, wv], axis=1).astype(jnp.bfloat16)  # (C, 3*HO)

    cap = _vmem_capacity_bytes()
    vmem_limit = min(int(cap * 0.7), 100 * 1024 * 1024)   # ~90 MiB v5e/v6e, ~45 MiB v7x
    budget = int(vmem_limit * 0.65)
    b_blk = _choose_batch_block(B, T, C, HO, jnp.dtype(x.dtype).itemsize, budget)
    n_blocks = pl.cdiv(B, b_blk)   # padded last block; padded rows never consumed

    kernel = functools.partial(_attn_kernel, n_heads=nH, head_size=H)
    return pl.pallas_call(
        kernel,
        out_shape=jax.ShapeDtypeStruct((B, T, HO), out_dtype),
        grid_spec=pltpu.PrefetchScalarGridSpec(
            num_scalar_prefetch=0,
            grid=(n_blocks,),
            in_specs=[
                pl.BlockSpec((b_blk, T, C), lambda b: (b, 0, 0)),
                pl.BlockSpec((C, 3 * HO), lambda b: (0, 0)),
            ],
            out_specs=pl.BlockSpec((b_blk, T, HO), lambda b: (b, 0, 0)),
        ),
        compiler_params=pltpu.CompilerParams(
            dimension_semantics=("parallel",),
            vmem_limit_bytes=vmem_limit,
        ),
    )(x, w_qkv)


def head_forward(x, w_key, w_query, w_value):
    """Single Head forward, matching the PyTorch module (n_heads = 1)."""
    return fused_heads_forward(x, (w_key,), (w_query,), (w_value,))


def head_reference(x, w_key, w_query, w_value):
    B, T, C = x.shape
    k = x @ w_key
    q = x @ w_query
    v = x @ w_value
    wei = (q @ jnp.swapaxes(k, -2, -1)) * (C ** -0.5)
    mask = jnp.tril(jnp.ones((T, T), dtype=bool))
    wei = jnp.where(mask, wei, -jnp.inf)
    wei = jax.nn.softmax(wei, axis=-1)
    return wei @ v


if __name__ == "__main__":
    key = jax.random.PRNGKey(0)
    B, T, C = 2, 16, N_EMBED
    head_size = 64

    kx, kk, kq, kv, kk2, kq2, kv2 = jax.random.split(key, 7)
    x = jax.random.normal(kx, (B, T, C), dtype=jnp.float32)
    bound = 1.0 / (C ** 0.5)
    w_key_m = jax.random.uniform(kk, (C, head_size), jnp.float32, -bound, bound)
    w_query_m = jax.random.uniform(kq, (C, head_size), jnp.float32, -bound, bound)
    w_value_m = jax.random.uniform(kv, (C, head_size), jnp.float32, -bound, bound)

    # ---- single Head (the PyTorch module's semantics) ----
    out = jax.block_until_ready(head_forward(x, w_key_m, w_query_m, w_value_m))
    ref = head_reference(x, w_key_m, w_query_m, w_value_m)
    assert out.shape == (B, T, head_size)
    # bf16 MXU operands (f32 accumulation) vs f32 reference -> loosened tolerance
    assert jnp.allclose(out, ref, atol=5e-2, rtol=5e-2), "single-head mismatch"

    # ---- fused multi-head path (layer-level fusion recommended by perf review) ----
    w_key2 = jax.random.uniform(kk2, (C, head_size), jnp.float32, -bound, bound)
    w_query2 = jax.random.uniform(kq2, (C, head_size), jnp.float32, -bound, bound)
    w_value2 = jax.random.uniform(kv2, (C, head_size), jnp.float32, -bound, bound)
    out2 = jax.block_until_ready(
        fused_heads_forward(x,
                            (w_key_m, w_key2),
                            (w_query_m, w_query2),
                            (w_value_m, w_value2)))
    ref2 = jnp.concatenate(
        [head_reference(x, w_key_m, w_query_m, w_value_m),
         head_reference(x, w_key2, w_query2, w_value2)], axis=-1)
    assert out2.shape == (B, T, 2 * head_size)
    assert jnp.allclose(out2, ref2, atol=5e-2, rtol=5e-2), "fused-heads mismatch"

    print("KERNEL_OK")
</pallas_src>

<mosaic_0001>
module attributes {stable_mosaic.version = 11 : i64} {
  func.func @_attn_kernel(%arg0: i32, %arg1: memref<1x16x384xf32, #tpu.memory_space<vmem>>, %arg2: memref<384x192xbf16, #tpu.memory_space<vmem>>, %arg3: memref<1x16x64xf32, #tpu.memory_space<vmem>>) attributes {dimension_semantics = [#tpu.dimension_semantics<parallel>], iteration_bounds = array<i64: 2>, scalar_prefetch = 0 : i64, scratch_operands = 0 : i64, tpu.core_type = #tpu.core_type<tc>, window_params = [{transform_indices = @transform_0, window_bounds = array<i64: 1, 16, 384>}, {pipeline_mode = #tpu.pipeline_mode<synchronous>, transform_indices = @transform_1, window_bounds = array<i64: 384, 192>}, {transform_indices = @transform_2, window_bounds = array<i64: 1, 16, 64>}]} {
    %c0 = arith.constant 0 : index
    %c0_0 = arith.constant 0 : index
    %c0_1 = arith.constant 0 : index
    %0 = vector.load %arg1[%c0, %c0_0, %c0_1] : memref<1x16x384xf32, #tpu.memory_space<vmem>>, vector<1x16x384xf32>
    %1 = vector.shape_cast %0 : vector<1x16x384xf32> to vector<16x384xf32>
    %2 = arith.truncf %1 : vector<16x384xf32> to vector<16x384xbf16>
    %c0_2 = arith.constant 0 : index
    %c0_3 = arith.constant 0 : index
    %3 = vector.load %arg2[%c0_2, %c0_3] : memref<384x192xbf16, #tpu.memory_space<vmem>>, vector<384x192xbf16>
    %cst = arith.constant dense<0.000000e+00> : vector<16x192xf32>
    %4 = tpu.matmul %2, %3, %cst {dimension_numbers = #tpu.dot_dimension_numbers<[1], [0], [0], [1], [0, 0, 1, 1], [], []>} : vector<16x384xbf16>, vector<384x192xbf16>, vector<16x192xf32> -> vector<16x192xf32>
    %5 = vector.shape_cast %4 : vector<16x192xf32> to vector<1x16x192xf32>
    %6 = tpu.iota {dimensions = array<i32: 0>} : vector<16x16xi32>
    %7 = tpu.iota {dimensions = array<i32: 1>} : vector<16x16xi32>
    %8 = arith.cmpi sle, %7, %6 : vector<16x16xi32>
    %cst_4 = arith.constant 0.000000e+00 : f32
    %cst_5 = arith.constant -1.000000e+30 : f32
    %9 = vector.broadcast %cst_4 : f32 to vector<16x16xf32>
    %10 = vector.broadcast %cst_5 : f32 to vector<16x16xf32>
    %11 = arith.select %8, %9, %10 : vector<16x16xi1>, vector<16x16xf32>
    %12 = vector.extract_strided_slice %5 {offsets = [0, 0, 0], sizes = [1, 16, 64], strides = [1, 1, 1]} : vector<1x16x192xf32> to vector<1x16x64xf32>
    %13 = arith.truncf %12 : vector<1x16x64xf32> to vector<1x16x64xbf16>
    %14 = vector.extract_strided_slice %5 {offsets = [0, 0, 64], sizes = [1, 16, 64], strides = [1, 1, 1]} : vector<1x16x192xf32> to vector<1x16x64xf32>
    %15 = arith.truncf %14 : vector<1x16x64xf32> to vector<1x16x64xbf16>
    %16 = vector.extract_strided_slice %5 {offsets = [0, 0, 128], sizes = [1, 16, 64], strides = [1, 1, 1]} : vector<1x16x192xf32> to vector<1x16x64xf32>
    %17 = arith.truncf %16 : vector<1x16x64xf32> to vector<1x16x64xbf16>
    "tpu.trace_start"() <{level = 10 : i32, message = "btd,bsd->bts"}> : () -> ()
    %cst_6 = arith.constant dense<0.000000e+00> : vector<1x16x16xf32>
    %18 = tpu.matmul %15, %13, %cst_6 {dimension_numbers = #tpu.dot_dimension_numbers<[2], [2], [1], [1], [0, 0, 0, 1, 1, 1], [0], [0]>} : vector<1x16x64xbf16>, vector<1x16x64xbf16>, vector<1x16x16xf32> -> vector<1x16x16xf32>
    "tpu.trace_stop"() : () -> ()
    %19 = vector.shape_cast %11 : vector<16x16xf32> to vector<1x16x16xf32>
    %20 = arith.addf %18, %19 : vector<1x16x16xf32>
    %cst_7 = arith.constant dense<0xFF800000> : vector<1x16xf32>
    %21 = vector.multi_reduction <maximumf>, %20, %cst_7 [2] : vector<1x16x16xf32> to vector<1x16xf32>
    %22 = vector.shape_cast %21 : vector<1x16xf32> to vector<1x16x1xf32>
    %23 = vector.broadcast %22 : vector<1x16x1xf32> to vector<1x16x16xf32>
    %24 = arith.subf %20, %23 : vector<1x16x16xf32>
    %25 = math.exp %24 : vector<1x16x16xf32>
    %cst_8 = arith.constant dense<0.000000e+00> : vector<1x16xf32>
    %26 = vector.multi_reduction <add>, %25, %cst_8 [2] : vector<1x16x16xf32> to vector<1x16xf32>
    %27 = vector.shape_cast %26 : vector<1x16xf32> to vector<1x16x1xf32>
    %28 = tpu.reciprocal %27 {approx = true} : vector<1x16x1xf32> -> vector<1x16x1xf32>
    %29 = vector.broadcast %28 : vector<1x16x1xf32> to vector<1x16x16xf32>
    %30 = arith.mulf %25, %29 : vector<1x16x16xf32>
    %31 = arith.truncf %30 : vector<1x16x16xf32> to vector<1x16x16xbf16>
    "tpu.trace_start"() <{level = 10 : i32, message = "bts,bsh->bth"}> : () -> ()
    %cst_9 = arith.constant dense<0.000000e+00> : vector<1x16x64xf32>
    %32 = tpu.matmul %31, %17, %cst_9 {dimension_numbers = #tpu.dot_dimension_numbers<[2], [1], [1], [2], [0, 0, 0, 1, 1, 2], [0], [0]>} : vector<1x16x16xbf16>, vector<1x16x64xbf16>, vector<1x16x64xf32> -> vector<1x16x64xf32>
    "tpu.trace_stop"() : () -> ()
    %c0_10 = arith.constant 0 : index
    %c0_11 = arith.constant 0 : index
    %c0_12 = arith.constant 0 : index
    %33 = vector.load %arg3[%c0_10, %c0_11, %c0_12] : memref<1x16x64xf32, #tpu.memory_space<vmem>>, vector<1x16x64xf32>
    tpu.vector_store %arg3[%c0_10, %c0_11, %c0_12], %32 {strides = array<i32>} : memref<1x16x64xf32, #tpu.memory_space<vmem>>, vector<1x16x64xf32>,
    return
  }
  func.func @transform_0(%arg0: i32) -> (i32, i32, i32) {
    %c0_i32 = arith.constant 0 : i32
    %c0_i32_0 = arith.constant 0 : i32
    %c0_i32_1 = arith.constant 0 : i32
    return %arg0, %c0_i32, %c0_i32_0 : i32, i32, i32
  }
  func.func @transform_1(%arg0: i32) -> (i32, i32) {
    %c0_i32 = arith.constant 0 : i32
    %c0_i32_0 = arith.constant 0 : i32
    %c0_i32_1 = arith.constant 0 : i32
    return %c0_i32, %c0_i32_0 : i32, i32
  }
  func.func @transform_2(%arg0: i32) -> (i32, i32, i32) {
    %c0_i32 = arith.constant 0 : i32
    %c0_i32_0 = arith.constant 0 : i32
    %c0_i32_1 = arith.constant 0 : i32
    return %arg0, %c0_i32, %c0_i32_0 : i32, i32, i32
  }
}

</mosaic_0001>

<llo_original>
// kernel: tpu_custom_call.1
$region0: #{tpu_custom_call.1}
  #allocation0 [shape = 'u32[]', space=smem, size = 0x4, offset = 0x4, fixed_abs, tag = 'smem constant byte address 0x4 - core index']
  #allocation1 [shape = 'u32[72,128]{1,0:T(1,128)}', space=vmem, size = 0x9000, scoped, tag = 'internal scratch']
  %s0 = inlined_call_operand.vmem [shape: f32[2,16,384], index: 0, kind: input, shape index: {}]
  %s1 = inlined_call_operand.vmem [shape: bf16[384,192], index: 1, kind: input, shape index: {}]
  %s2 = inlined_call_operand.hbm [shape: f32[2,16,64], index: 2, kind: output, shape index: {}]
  %s3 = sld [smem:[#allocation0]]
  $region41: #{tpu_custom_call.1} parent=0
    _
  %s5 = ssub.s32 1, %s3
  %s6 = scalar_select 0, %s5, %s3
  $region1: #{tpu_custom_call.1} parent=0
    #allocation2 [shape = 'u8[16384]{0}', space=vmem, size = 0x4000, scoped, tag = 'output window, operand 0']
    #allocation3 [shape = 's32[2]{0}', space=sflag, size = 0x8, scoped, tag = 'scoped memory for tpu_custom_call.1']
    %7 = vsyncpa [#allocation3], 0
    %s8 = scalar_lea.sflag [#allocation3], 1
    %9 = vsyncpa %s8, 0
    loop: start=0, step=1, limit=4
    $region2: #{tpu_custom_call.1} parent=1 // loop_pre_header
      _
    $region3: #{tpu_custom_call.1} parent=1 // loop_header
      %s11 = sphi 0, %s15
      %p12 = scmp.ge.s32.totalorder %s11, 4
      %s21 = sphi 0, %s23
      %s24 = sphi 0, %s21
      %s25 = sphi 0, %s24
      %s41 = sphi 0, %s25
      %s45 = sphi 0, %s45
      %s47 = sphi 0, %s45
      %s48 = sphi 0, %s47
      %s62 = sphi 0, %s48
      %s68 = sphi 0, %s70
      %s71 = sphi 0, %s68
      %s72 = sphi 0, %s71
      %s88 = sphi 0, %s72
    $region4: #{tpu_custom_call.1} parent=1 // loop_header_branch
      %14 = sbr.rel (%p12) target = $region8
    $region5: #{tpu_custom_call.1} parent=1 // loop_body
      %s16 = ssub.s32 %s11, 1
      %s17 = ssub.s32 %s11, 2
      %s18 = sadd.s32 %s11, 1
      %s19 = ssub.s32 %s11, %s18
      %p20 = scmp.eq.s32.totalorder %s19, 0
      %s22 = sadd.s32 %s21, 1
      %s23 = scalar_select %p20, %s21, %s22
      %p26 = pneg %p20
      %p27 = scmp.eq.s32.totalorder %s11, 1
      %p28 = por %p26, %p27
      %p29 = scmp.ne.s32.totalorder %s21, %s24
      %p30 = scmp.eq.s32.totalorder %s11, 0
      %p31 = por %p29, %p30
      %p32 = scmp.ne.s32.totalorder %s21, %s24
      %p33 = scmp.eq.s32.totalorder %s16, 1
      %p34 = por %p32, %p33
      %p35 = scmp.ne.s32.totalorder %s24, %s25
      %p36 = scmp.eq.s32.totalorder %s16, 0
      %p37 = por %p35, %p36
      %p38 = scmp.ne.s32.totalorder %s24, %s25
      %p39 = scmp.eq.s32.totalorder %s17, 1
      %p40 = por %p38, %p39
      %p42 = scmp.ne.s32.totalorder %s25, %s41
      %p43 = scmp.eq.s32.totalorder %s17, 0
      %p44 = por %p42, %p43
      %s46 = sadd.s32 %s45, 1
      %p49 = scmp.eq.s32.totalorder %s11, 1
      %p50 = scmp.ne.s32.totalorder %s45, %s47
      %p51 = scmp.eq.s32.totalorder %s11, 0
      %p52 = por %p50, %p51
      %p53 = scmp.ne.s32.totalorder %s45, %s47
      %p54 = scmp.eq.s32.totalorder %s16, 1
      %p55 = por %p53, %p54
      %p56 = scmp.ne.s32.totalorder %s47, %s48
      %p57 = scmp.eq.s32.totalorder %s16, 0
      %p58 = por %p56, %p57
      %p59 = scmp.ne.s32.totalorder %s47, %s48
      %p60 = scmp.eq.s32.totalorder %s17, 1
      %p61 = por %p59, %p60
      %p63 = scmp.ne.s32.totalorder %s48, %s62
      %p64 = scmp.eq.s32.totalorder %s17, 0
      %p65 = por %p63, %p64
      %s66 = ssub.s32 %s11, %s18
      %p67 = scmp.eq.s32.totalorder %s66, 0
      %s69 = sadd.s32 %s68, 1
      %s70 = scalar_select %p67, %s68, %s69
      %p73 = pneg %p67
      %p74 = scmp.eq.s32.totalorder %s11, 1
      %p75 = por %p73, %p74
      %p76 = scmp.ne.s32.totalorder %s68, %s71
      %p77 = scmp.eq.s32.totalorder %s11, 0
      %p78 = por %p76, %p77
      %p79 = scmp.ne.s32.totalorder %s68, %s71
      %p80 = scmp.eq.s32.totalorder %s16, 1
      %p81 = por %p79, %p80
      %p82 = scmp.ne.s32.totalorder %s71, %s72
      %p83 = scmp.eq.s32.totalorder %s16, 0
      %p84 = por %p82, %p83
      %p85 = scmp.ne.s32.totalorder %s71, %s72
      %p86 = scmp.eq.s32.totalorder %s17, 1
      %p87 = por %p85, %p86
      %p89 = scmp.ne.s32.totalorder %s72, %s88
      %p90 = scmp.eq.s32.totalorder %s17, 0
      %p91 = por %p89, %p90
      %p92 = scmp.le.s32.totalorder 1, %s11
      %p93 = scmp.lt.s32.totalorder %s11, 3
      %p94 = pnand %p92, %p93
      %p95 = pneg %p94
      // Predicated region
      $region9: #{tpu_custom_call.1} parent=5 // pred_check
        _
      $region10: #{tpu_custom_call.1} parent=5 // pred_check_branch
        %97 = sbr.rel (%p94) target = $region12
      $region11: #{tpu_custom_call.1} parent=5 // pred_region
        %s98 = ssub.s32 %s11, 1
        // Predicated region
        $region13: #{tpu_custom_call.1} parent=11 // pred_check
          %p99 = pneg %p58
        $region14: #{tpu_custom_call.1} parent=11 // pred_check_branch
          %101 = sbr.rel (%p99) target = $region16
        $region15: #{tpu_custom_call.1} parent=11 // pred_region
          _
        $region16: #{tpu_custom_call.1} parent=11 // pred_fallthru
          _
      $region12: #{tpu_custom_call.1} parent=5 // pred_fallthru
        _
      %p102 = scmp.lt.s32.totalorder %s11, 2
      // Predicated region
      $region17: #{tpu_custom_call.1} parent=5 // pred_check
        %p103 = pneg %p102
      $region18: #{tpu_custom_call.1} parent=5 // pred_check_branch
        %105 = sbr.rel (%p103) target = $region20
      $region19: #{tpu_custom_call.1} parent=5 // pred_region
        // Predicated region
        $region21: #{tpu_custom_call.1} parent=19 // pred_check
          %p106 = pneg %p31
        $region22: #{tpu_custom_call.1} parent=19 // pred_check_branch
          %108 = sbr.rel (%p106) target = $region24
        $region23: #{tpu_custom_call.1} parent=19 // pred_region
          %p109 = scmp.lt.s32.totalorder %s11, 1
          %s110 = scalar_select %p109, %s11, 1
          %s111 = smul.addr %s110, 6
          %s112 = smul.addr %s111, 8
          %s113 = scalar_lea.vmem %s0, %s112
        $region24: #{tpu_custom_call.1} parent=19 // pred_fallthru
          _
      $region20: #{tpu_custom_call.1} parent=5 // pred_fallthru
        _
      %p114 = scmp.le.s32.totalorder 1, %s11
      %p115 = scmp.lt.s32.totalorder %s11, 3
      %p116 = pnand %p114, %p115
      %p117 = pneg %p116
      // Predicated region
      $region25: #{tpu_custom_call.1} parent=5 // pred_check
        _
      $region26: #{tpu_custom_call.1} parent=5 // pred_check_branch
        %119 = sbr.rel (%p116) target = $region28
      $region27: #{tpu_custom_call.1} parent=5 // pred_region
        %s120 = ssub.s32 %s11, 1
        %p121 = scmp.lt.s32.totalorder %s16, 1
        %s122 = scalar_select %p121, %s16, 1
        %s123 = smul.addr %s122, 6
        %s124 = smul.addr %s123, 8
        %s125 = scalar_lea.vmem %s0, %s124
        %p126 = pneg %p37
        %p127 = pneg %p34
        %p128 = pneg %p58
        %p129 = pneg %p55
        %p130 = pneg %p84
        %p131 = pneg %p81
        %s132 = sand.u32 %s71, 1
        %s133 = scalar_lea.sflag [#allocation3], %s132
        %s134 = sand.u32 %s71, 1
        %s135 = smul.addr %s134, 16
        %s136 = scalar_lea.vmem [#allocation2], %s135
        %p137 = scmp.lt.s32.totalorder %s16, 1
        %s138 = scalar_select %p137, %s16, 1
        %s139 = smul.addr %s138, 6
        %s140 = smul.addr %s139, 8
        %s141 = scalar_lea.vmem %s0, %s140
        %v143 = vld [vmem:[%s141] sm:$0xff]
        %v144 = vld [vmem:[%s141 + $0x8] sm:$0xff]
        %v145 = vld [vmem:[%s141 + $0x10] sm:$0xff]
        %v146 = vld [vmem:[%s141 + $0x18] sm:$0xff]
        %v147 = vld [vmem:[%s141 + $0x20] sm:$0xff]
        %v148 = vld [vmem:[%s141 + $0x28] sm:$0xff]
        %v149 = vpack.c.bf16 %v146, %v143
        %v150 = vpack.c.bf16 %v147, %v144
        %v151 = vpack.c.bf16 %v148, %v145
        %v152 = vld [vmem:[%s1] sm:$0xff]
        %v153 = vld [vmem:[%s1 + $0x8] sm:$0xff]
        %v154 = vld [vmem:[%s1 + $0x10] sm:$0xff]
        %v155 = vld [vmem:[%s1 + $0x18] sm:$0xff]
        %v156 = vld [vmem:[%s1 + $0x20] sm:$0xff]
        %v157 = vld [vmem:[%s1 + $0x28] sm:$0xff]
        %v158 = vld [vmem:[%s1 + $0x30] sm:$0xff]
        %v159 = vld [vmem:[%s1 + $0x38] sm:$0xff]
        %v160 = vld [vmem:[%s1 + $0x40] sm:$0xff]
        %v161 = vld [vmem:[%s1 + $0x48] sm:$0xff]
        %v162 = vld [vmem:[%s1 + $0x50] sm:$0xff]
        %v163 = vld [vmem:[%s1 + $0x58] sm:$0xff]
        %v164 = vld [vmem:[%s1 + $0x60] sm:$0xff]
        %v165 = vld [vmem:[%s1 + $0x68] sm:$0xff]
        %v166 = vld [vmem:[%s1 + $0x70] sm:$0xff]
        %v167 = vld [vmem:[%s1 + $0x78] sm:$0xff]
        %v168 = vld [vmem:[%s1 + $0x80] sm:$0xff]
        %v169 = vld [vmem:[%s1 + $0x88] sm:$0xff]
        %v170 = vld [vmem:[%s1 + $0x90] sm:$0xff]
        %v171 = vld [vmem:[%s1 + $0x98] sm:$0xff]
        %v172 = vld [vmem:[%s1 + $0xa0] sm:$0xff]
        %v173 = vld [vmem:[%s1 + $0xa8] sm:$0xff]
        %v174 = vld [vmem:[%s1 + $0xb0] sm:$0xff]
        %v175 = vld [vmem:[%s1 + $0xb8] sm:$0xff]
        %v176 = vld [vmem:[%s1 + $0xc0] sm:$0xff]
        %v177 = vld [vmem:[%s1 + $0xc8] sm:$0xff]
        %v178 = vld [vmem:[%s1 + $0xd0] sm:$0xff]
        %v179 = vld [vmem:[%s1 + $0xd8] sm:$0xff]
        %v180 = vld [vmem:[%s1 + $0xe0] sm:$0xff]
        %v181 = vld [vmem:[%s1 + $0xe8] sm:$0xff]
        %v182 = vld [vmem:[%s1 + $0xf0] sm:$0xff]
        %v183 = vld [vmem:[%s1 + $0xf8] sm:$0xff]
        %v184 = vld [vmem:[%s1 + $0x100] sm:$0xff]
        %v185 = vld [vmem:[%s1 + $0x108] sm:$0xff]
        %v186 = vld [vmem:[%s1 + $0x110] sm:$0xff]
        %v187 = vld [vmem:[%s1 + $0x118] sm:$0xff]
        %v188 = vld [vmem:[%s1 + $0x120] sm:$0xff]
        %v189 = vld [vmem:[%s1 + $0x128] sm:$0xff]
        %v190 = vld [vmem:[%s1 + $0x130] sm:$0xff]
        %v191 = vld [vmem:[%s1 + $0x138] sm:$0xff]
        %v192 = vld [vmem:[%s1 + $0x140] sm:$0xff]
        %v193 = vld [vmem:[%s1 + $0x148] sm:$0xff]
        %v194 = vld [vmem:[%s1 + $0x150] sm:$0xff]
        %v195 = vld [vmem:[%s1 + $0x158] sm:$0xff]
        %v196 = vld [vmem:[%s1 + $0x160] sm:$0xff]
        %v197 = vld [vmem:[%s1 + $0x168] sm:$0xff]
        %v198 = vld [vmem:[%s1 + $0x170] sm:$0xff]
        %v199 = vld [vmem:[%s1 + $0x178] sm:$0xff]
        %v248 = vunpack.c.l.b16 %v152
        %v249 = vunpack.c.h.b16 %v152
        %v250 = vunpack.c.l.b16 %v153
        %v251 = vunpack.c.h.b16 %v153
        %v252 = vunpack.c.l.b16 %v154
        %v253 = vunpack.c.h.b16 %v154
        %v254 = vunpack.c.l.b16 %v155
        %v255 = vunpack.c.h.b16 %v155
        %v256 = vunpack.c.l.b16 %v156
        %v257 = vunpack.c.h.b16 %v156
        %v258 = vunpack.c.l.b16 %v157
        %v259 = vunpack.c.h.b16 %v157
        %v260 = vunpack.c.l.b16 %v158
        %v261 = vunpack.c.h.b16 %v158
        %v262 = vunpack.c.l.b16 %v159
        %v263 = vunpack.c.h.b16 %v159
        %v264 = vunpack.c.l.b16 %v160
        %v265 = vunpack.c.h.b16 %v160
        %v266 = vunpack.c.l.b16 %v161
        %v267 = vunpack.c.h.b16 %v161
        %v268 = vunpack.c.l.b16 %v162
        %v269 = vunpack.c.h.b16 %v162
        %v270 = vunpack.c.l.b16 %v163
        %v271 = vunpack.c.h.b16 %v163
        %v272 = vunpack.c.l.b16 %v164
        %v273 = vunpack.c.h.b16 %v164
        %v274 = vunpack.c.l.b16 %v165
        %v275 = vunpack.c.h.b16 %v165
        %v276 = vunpack.c.l.b16 %v166
        %v277 = vunpack.c.h.b16 %v166
        %v278 = vunpack.c.l.b16 %v167
        %v279 = vunpack.c.h.b16 %v167
        %v280 = vunpack.c.l.b16 %v168
        %v281 = vunpack.c.h.b16 %v168
        %v282 = vunpack.c.l.b16 %v169
        %v283 = vunpack.c.h.b16 %v169
        %v284 = vunpack.c.l.b16 %v170
        %v285 = vunpack.c.h.b16 %v170
        %v286 = vunpack.c.l.b16 %v171
        %v287 = vunpack.c.h.b16 %v171
        %v288 = vunpack.c.l.b16 %v172
        %v289 = vunpack.c.h.b16 %v172
        %v290 = vunpack.c.l.b16 %v173
        %v291 = vunpack.c.h.b16 %v173
        %v292 = vunpack.c.l.b16 %v174
        %v293 = vunpack.c.h.b16 %v174
        %v294 = vunpack.c.l.b16 %v175
        %v295 = vunpack.c.h.b16 %v175
        %v296 = vunpack.c.l.b16 %v176
        %v297 = vunpack.c.h.b16 %v176
        %v298 = vunpack.c.l.b16 %v177
        %v299 = vunpack.c.h.b16 %v177
        %v300 = vunpack.c.l.b16 %v178
        %v301 = vunpack.c.h.b16 %v178
        %v302 = vunpack.c.l.b16 %v179
        %v303 = vunpack.c.h.b16 %v179
        %v304 = vunpack.c.l.b16 %v180
        %v305 = vunpack.c.h.b16 %v180
        %v306 = vunpack.c.l.b16 %v181
        %v307 = vunpack.c.h.b16 %v181
        %v308 = vunpack.c.l.b16 %v182
        %v309 = vunpack.c.h.b16 %v182
        %v310 = vunpack.c.l.b16 %v183
        %v311 = vunpack.c.h.b16 %v183
        %v312 = vunpack.c.l.b16 %v184
        %v313 = vunpack.c.h.b16 %v184
        %v314 = vunpack.c.l.b16 %v185
        %v315 = vunpack.c.h.b16 %v185
        %v316 = vunpack.c.l.b16 %v186
        %v317 = vunpack.c.h.b16 %v186
        %v318 = vunpack.c.l.b16 %v187
        %v319 = vunpack.c.h.b16 %v187
        %v320 = vunpack.c.l.b16 %v188
        %v321 = vunpack.c.h.b16 %v188
        %v322 = vunpack.c.l.b16 %v189
        %v323 = vunpack.c.h.b16 %v189
        %v324 = vunpack.c.l.b16 %v190
        %v325 = vunpack.c.h.b16 %v190
        %v326 = vunpack.c.l.b16 %v191
        %v327 = vunpack.c.h.b16 %v191
        %v328 = vunpack.c.l.b16 %v192
        %v329 = vunpack.c.h.b16 %v192
        %v330 = vunpack.c.l.b16 %v193
        %v331 = vunpack.c.h.b16 %v193
        %v332 = vunpack.c.l.b16 %v194
        %v333 = vunpack.c.h.b16 %v194
        %v334 = vunpack.c.l.b16 %v195
        %v335 = vunpack.c.h.b16 %v195
        %v336 = vunpack.c.l.b16 %v196
        %v337 = vunpack.c.h.b16 %v196
        %v338 = vunpack.c.l.b16 %v197
        %v339 = vunpack.c.h.b16 %v197
        %v340 = vunpack.c.l.b16 %v198
        %v341 = vunpack.c.h.b16 %v198
        %v342 = vunpack.c.l.b16 %v199
        %v343 = vunpack.c.h.b16 %v199
        %v344 = vpack.c.b16 %v250, %v248
        %v345 = vpack.c.b16 %v251, %v249
        %v346 = vpack.c.b16 %v254, %v252
        %v347 = vpack.c.b16 %v255, %v253
        %v348 = vpack.c.b16 %v258, %v256
        %v349 = vpack.c.b16 %v259, %v257
        %v350 = vpack.c.b16 %v262, %v260
        %v351 = vpack.c.b16 %v263, %v261
        %v352 = vpack.c.b16 %v266, %v264
        %v353 = vpack.c.b16 %v267, %v265
        %v354 = vpack.c.b16 %v270, %v268
        %v355 = vpack.c.b16 %v271, %v269
        %v356 = vpack.c.b16 %v274, %v272
        %v357 = vpack.c.b16 %v275, %v273
        %v358 = vpack.c.b16 %v278, %v276
        %v359 = vpack.c.b16 %v279, %v277
        %v360 = vpack.c.b16 %v282, %v280
        %v361 = vpack.c.b16 %v283, %v281
        %v362 = vpack.c.b16 %v286, %v284
        %v363 = vpack.c.b16 %v287, %v285
        %v364 = vpack.c.b16 %v290, %v288
        %v365 = vpack.c.b16 %v291, %v289
        %v366 = vpack.c.b16 %v294, %v292
        %v367 = vpack.c.b16 %v295, %v293
        %v368 = vpack.c.b16 %v298, %v296
        %v369 = vpack.c.b16 %v299, %v297
        %v370 = vpack.c.b16 %v302, %v300
        %v371 = vpack.c.b16 %v303, %v301
        %v372 = vpack.c.b16 %v306, %v304
        %v373 = vpack.c.b16 %v307, %v305
        %v374 = vpack.c.b16 %v310, %v308
        %v375 = vpack.c.b16 %v311, %v309
        %v376 = vpack.c.b16 %v314, %v312
        %v377 = vpack.c.b16 %v315, %v313
        %v378 = vpack.c.b16 %v318, %v316
        %v379 = vpack.c.b16 %v319, %v317
        %v380 = vpack.c.b16 %v322, %v320
        %v381 = vpack.c.b16 %v323, %v321
        %v382 = vpack.c.b16 %v326, %v324
        %v383 = vpack.c.b16 %v327, %v325
        %v384 = vpack.c.b16 %v330, %v328
        %v385 = vpack.c.b16 %v331, %v329
        %v386 = vpack.c.b16 %v334, %v332
        %v387 = vpack.c.b16 %v335, %v333
        %v388 = vpack.c.b16 %v338, %v336
        %v389 = vpack.c.b16 %v339, %v337
        %v390 = vpack.c.b16 %v342, %v340
        %v391 = vpack.c.b16 %v343, %v341
        %440 = vmatpush.bf16.msra.mxu0 %v358
        %441 = vmatpush.bf16.msra.mxu0 %v356
        %442 = vmatpush.bf16.msra.mxu0 %v354
        %443 = vmatpush.bf16.msra.mxu0 %v352
        %444 = vmatpush.bf16.msra.mxu0 %v350
        %445 = vmatpush.bf16.msra.mxu0 %v348
        %446 = vmatpush.bf16.msra.mxu0 %v346
        %447 = vmatpush.bf16.msra.mxu0 %v344
        %448 = vmatmul.bf16.gmra.mxu0 %v149
        %v449 = vpop.f32.mrf.mxu0
        %v450 = vadd.f32 0.0, %v449
        %v451 = vpop.f32.mrf.mxu0
        %v452 = vadd.f32 0.0, %v451
        %453 = vdwg.mxu0
        %454 = vmatpush.bf16.msra.mxu0 %v374
        %455 = vmatpush.bf16.msra.mxu0 %v372
        %456 = vmatpush.bf16.msra.mxu0 %v370
        %457 = vmatpush.bf16.msra.mxu0 %v368
        %458 = vmatpush.bf16.msra.mxu0 %v366
        %459 = vmatpush.bf16.msra.mxu0 %v364
        %460 = vmatpush.bf16.msra.mxu0 %v362
        %461 = vmatpush.bf16.msra.mxu0 %v360
        %462 = vmatmul.bf16.gmra.mxu0 %v150
        %v463 = vpop.f32.mrf.mxu0
        %v464 = vadd.f32 %v450, %v463
        %v465 = vpop.f32.mrf.mxu0
        %v466 = vadd.f32 %v452, %v465
        %467 = vdwg.mxu0
        %468 = vmatpush.bf16.msra.mxu0 %v390
        %469 = vmatpush.bf16.msra.mxu0 %v388
        %470 = vmatpush.bf16.msra.mxu0 %v386
        %471 = vmatpush.bf16.msra.mxu0 %v384
        %472 = vmatpush.bf16.msra.mxu0 %v382
        %473 = vmatpush.bf16.msra.mxu0 %v380
        %474 = vmatpush.bf16.msra.mxu0 %v378
        %475 = vmatpush.bf16.msra.mxu0 %v376
        %476 = vmatmul.bf16.gmra.mxu0 %v151
        %v477 = vpop.f32.mrf.mxu0
        %v478 = vadd.f32 %v464, %v477
        %v479 = vpop.f32.mrf.mxu0
        %v480 = vadd.f32 %v466, %v479
        %481 = vdwg.mxu0
        %482 = vmatpush.bf16.msra.mxu0 %v359
        %483 = vmatpush.bf16.msra.mxu0 %v357
        %484 = vmatpush.bf16.msra.mxu0 %v355
        %485 = vmatpush.bf16.msra.mxu0 %v353
        %486 = vmatpush.bf16.msra.mxu0 %v351
        %487 = vmatpush.bf16.msra.mxu0 %v349
        %488 = vmatpush.bf16.msra.mxu0 %v347
        %489 = vmatpush.bf16.msra.mxu0 %v345
        %490 = vmatmul.bf16.gmra.mxu0 %v149
        %v491 = vpop.f32.mrf.mxu0
        %v492 = vadd.f32 0.0, %v491
        %v493 = vpop.f32.mrf.mxu0
        %v494 = vadd.f32 0.0, %v493
        %495 = vdwg.mxu0
        %496 = vmatpush.bf16.msra.mxu0 %v375
        %497 = vmatpush.bf16.msra.mxu0 %v373
        %498 = vmatpush.bf16.msra.mxu0 %v371
        %499 = vmatpush.bf16.msra.mxu0 %v369
        %500 = vmatpush.bf16.msra.mxu0 %v367
        %501 = vmatpush.bf16.msra.mxu0 %v365
        %502 = vmatpush.bf16.msra.mxu0 %v363
        %503 = vmatpush.bf16.msra.mxu0 %v361
        %504 = vmatmul.bf16.gmra.mxu0 %v150
        %v505 = vpop.f32.mrf.mxu0
        %v506 = vadd.f32 %v492, %v505
        %v507 = vpop.f32.mrf.mxu0
        %v508 = vadd.f32 %v494, %v507
        %509 = vdwg.mxu0
        %510 = vmatpush.bf16.msra.mxu0 %v391
        %511 = vmatpush.bf16.msra.mxu0 %v389
        %512 = vmatpush.bf16.msra.mxu0 %v387
        %513 = vmatpush.bf16.msra.mxu0 %v385
        %514 = vmatpush.bf16.msra.mxu0 %v383
        %515 = vmatpush.bf16.msra.mxu0 %v381
        %516 = vmatpush.bf16.msra.mxu0 %v379
        %517 = vmatpush.bf16.msra.mxu0 %v377
        %518 = vmatmul.bf16.gmra.mxu0 %v151
        %v519 = vpop.f32.mrf.mxu0
        %v520 = vadd.f32 %v506, %v519
        %v521 = vpop.f32.mrf.mxu0
        %v522 = vadd.f32 %v508, %v521
        %523 = vdwg.mxu0
        %v524 = vlaneseq
        %v525 = vshrl.u32 %v524, 7
        %v526 = vadd.s32 %v525, 8
        %v527 = vlaneseq
        %v528 = vand.u32 %v527, 127
        %vm529 = vcmp.le.s32.totalorder %v528, %v525
        %vm530 = vcmp.le.s32.totalorder %v528, %v526
        %v531 = vsel %vm529, 0.0, -1e+30
        %v532 = vsel %vm530, 0.0, -1e+30
        %v533 = vpack.c.bf16 %v478, %v478
        %v534 = vpack.c.bf16 %v480, %v480
        %v535 = vpack.c.bf16 %v520, %v520
        %v536 = vpack.c.bf16 %v522, %v522
        %v539 = vunpack.c.l.b16 %v533
        %v540 = vunpack.c.l.b16 %v534
        %v541 = vpack.c.b16 %v540, %v539
        %542 = vrot.lane.b32.xlu0 %v541, 64
        %v543 = vpop.permute.xlu0 %542
        %vm544 = vcmask 523264
        %v546 = vsel %vm544, %v543, 0
        %v549 = vsel %vm544, %v541, 0
        %551 = vmatpush.bf16.xpose.msra.mxu0 0
        %552 = vmatpush.bf16.xpose.msra.mxu0 0
        %553 = vmatpush.bf16.xpose.msra.mxu0 0
        %554 = vmatpush.bf16.xpose.msra.mxu0 0
        %555 = vmatpush.bf16.xpose.msra.mxu0 0
        %556 = vmatpush.bf16.xpose.msra.mxu0 0
        %557 = vmatpush.bf16.xpose.msra.mxu0 0
        %558 = vmatpush.bf16.xpose.msra.mxu0 %v549
        %559 = vmatmul.bf16.gmra.mxu0 %v546
        %v560 = vpop.f32.mrf.mxu0
        %v561 = vadd.f32 %v531, %v560
        %v562 = vpop.f32.mrf.mxu0
        %v563 = vadd.f32 %v532, %v562
        %564 = vdwg.mxu0
        %vm565 = vcmask 130048
        %v566 = vsel %vm565, %v561, -inf
        %567 = vmax.xlane.f32.xlu0 %v566
        %v568 = vpop.xlane.xlu0 %567
        %v569 = vsel %vm565, %v563, -inf
        %570 = vmax.xlane.f32.xlu0 %v569
        %v571 = vpop.xlane.xlu0 %570
        %v572 = vsub.f32 %v561, %v568
        %v573 = vsub.f32 %v563, %v571
        %v574 = vmul.f32 %v572, 1.442695
        %v575 = vpow.pop %v574
        %v576 = vmul.f32 %v573, 1.442695
        %v577 = vpow.pop %v576
        %v578 = vsel %vm565, %v575, 0.0
        %579 = vadd.xlane.f32.xlu0 %v578
        %v580 = vpop.xlane.xlu0 %579
        %v581 = vsel %vm565, %v577, 0.0
        %582 = vadd.xlane.f32.xlu0 %v581
        %v583 = vpop.xlane.xlu0 %582
        %v584 = vrcp.pop %v580
        %v585 = vrcp.pop %v583
        %v586 = vmul.f32 %v575, %v584
        %v587 = vmul.f32 %v577, %v585
        %v588 = vpack.c.bf16 %v586, %v586
        %v589 = vpack.c.bf16 %v587, %v587
        %v592 = vunpack.c.l.b16 %v588
        %v593 = vunpack.c.l.b16 %v589
        %v594 = vpack.c.b16 %v593, %v592
        %v597 = vunpack.c.l.b16 %v535
        %v598 = vunpack.c.l.b16 %v536
        %v599 = vpack.c.b16 %v598, %v597
        %v602 = vsel %vm565, %v594, 0
        %604 = vmatpush.bf16.msra.mxu0 0
        %605 = vmatpush.bf16.msra.mxu0 0
        %606 = vmatpush.bf16.msra.mxu0 0
        %607 = vmatpush.bf16.msra.mxu0 0
        %608 = vmatpush.bf16.msra.mxu0 0
        %609 = vmatpush.bf16.msra.mxu0 0
        %610 = vmatpush.bf16.msra.mxu0 0
        %611 = vmatpush.bf16.msra.mxu0 %v599
        %612 = vmatmul.bf16.gmra.mxu0 %v602
        %v613 = vpop.f32.mrf.mxu0
        %v614 = vadd.f32 0.0, %v613
        %v615 = vpop.f32.mrf.mxu0
        %v616 = vadd.f32 0.0, %v615
        %617 = vdwg.mxu0
        %618 = vst.msk [vmem:[%s136] sm:$0xff] %vm544, %v614
        %619 = vst.msk [vmem:[%s136 + $0x8] sm:$0xff] %vm544, %v616
        %s620 = sand.u32 %s71, 1
        %s621 = scalar_lea.sflag [#allocation3], %s620
        %s622 = sand.u32 %s71, 1
        %s623 = smul.addr %s622, 16
        %s624 = scalar_lea.vmem [#allocation2], %s623
        // Predicated region
        $region29: #{tpu_custom_call.1} parent=27 // pred_check
          %p625 = pneg %p81
        $region30: #{tpu_custom_call.1} parent=27 // pred_check_branch
          %627 = sbr.rel (%p625) target = $region32
        $region31: #{tpu_custom_call.1} parent=27 // pred_region
          %629 = vsyncadd %s621, 0
          %s630 = smul.addr %s16, 2
          %s631 = smul.addr %s630, 8
          %s632 = scalar_lea.hbm %s2, %s631
          %s633 = sshll.u32 %s624, 4
          %s634 = int_to_ptr.vmem [resolvable:$true] %s633
          %s635 = sshll.u32 %s632, 4
          %s636 = int_to_ptr.hbm [resolvable:$true] %s635
          %641 = dma.vmem_to_hbm [thread:$0]  %s634, 256, %s636, %s621, 128, 128, 8
        $region32: #{tpu_custom_call.1} parent=27 // pred_fallthru
          _
      $region28: #{tpu_custom_call.1} parent=5 // pred_fallthru
        _
      %p642 = scmp.le.s32.totalorder 2, %s11
      // Predicated region
      $region33: #{tpu_custom_call.1} parent=5 // pred_check
        %p643 = pneg %p642
      $region34: #{tpu_custom_call.1} parent=5 // pred_check_branch
        %645 = sbr.rel (%p643) target = $region36
      $region35: #{tpu_custom_call.1} parent=5 // pred_region
        %s646 = ssub.s32 %s11, 2
        // Predicated region
        $region37: #{tpu_custom_call.1} parent=35 // pred_check
          %p647 = pneg %p87
        $region38: #{tpu_custom_call.1} parent=35 // pred_check_branch
          %649 = sbr.rel (%p647) target = $region40
        $region39: #{tpu_custom_call.1} parent=35 // pred_region
          %s650 = sand.u32 %s72, 1
          %s651 = scalar_lea.sflag [#allocation3], %s650
          %s652 = sand.u32 %s72, 1
          %s653 = smul.addr %s652, 16
          %s654 = scalar_lea.vmem [#allocation2], %s653
          %656 = dma.done %s651, 256
        $region40: #{tpu_custom_call.1} parent=35 // pred_fallthru
          _
      $region36: #{tpu_custom_call.1} parent=5 // pred_fallthru
        _
    $region6: #{tpu_custom_call.1} parent=1 // loop_footer
      %s15 = sadd.s32 1, %s11
    $region7: #{tpu_custom_call.1} parent=1 // loop_footer_branch
      %10 = sbr.rel target = $region3
    $region8: #{tpu_custom_call.1} parent=1 // loop_exit
      _
    %657 = vsyncpa [#allocation3], 1
    %s658 = scalar_lea.sflag [#allocation3], 1
    %659 = vsyncpa %s658, 1

</llo_original>
